<compile_context>
chip_gen: v6e
topology: v6e:2x2x1
jax: 0.10.0
libtpu: 0.0.40
codegen_flags: <defaults>
</compile_context>

<pallas_src>
import math
import functools

import jax
import jax.numpy as jnp
from jax import lax
from jax.experimental import pallas as pl
from jax.experimental.pallas import tpu as pltpu


# ----------------------------------------------------------------------------
# Buffer construction (mirrors nn.Module.__init__).
# ----------------------------------------------------------------------------
def make_pos_embedding(emb_size: int, maxlen: int = 5000, dtype=jnp.float32):
    den = jnp.exp(
        -jnp.arange(0, emb_size, 2, dtype=jnp.float32) * math.log(10000.0) / emb_size
    )
    pos = jnp.arange(0, maxlen, dtype=jnp.float32).reshape(maxlen, 1)
    pe = jnp.zeros((maxlen, emb_size), dtype=jnp.float32)
    pe = pe.at[:, 0::2].set(jnp.sin(pos * den))
    pe = pe.at[:, 1::2].set(jnp.cos(pos * den))
    return pe[:, None, :].astype(dtype)  # (maxlen, 1, emb_size)


# ----------------------------------------------------------------------------
# Kernel: broadcast add (over the seq axis) + inverted dropout.
# Block shapes:  x/out -> (TB, TS, D),  pe -> (TB, 1, D).
# ----------------------------------------------------------------------------
def _pos_enc_kernel(
    seed_ref, x_ref, pe_ref, o_ref, *,
    dropout_p: float, seq_len: int, emb: int, block_b: int, block_s: int,
):
    x = x_ref[...]                                  # (TB, TS, D), input dtype
    y = x + pe_ref[...].astype(x.dtype)             # broadcast (TB, 1, D) over TS

    if dropout_p > 0.0:
        bi = pl.program_id(0)
        si = pl.program_id(1)
        shp = x.shape

        # Global element index -> dropout mask is deterministic and independent
        # of the chosen tiling / grid parallelism.
        b_io = lax.broadcasted_iota(jnp.int32, shp, 0)
        s_io = lax.broadcasted_iota(jnp.int32, shp, 1)
        d_io = lax.broadcasted_iota(jnp.int32, shp, 2)
        gidx = ((bi * block_b + b_io) * seq_len + (si * block_s + s_io)) * emb + d_io

        # murmur3-style finalizer (int32 wrapping arithmetic, logical shifts).
        h = gidx + seed_ref[0] * jnp.int32(-1640531527)         # seed * 0x9E3779B9
        h = h ^ lax.shift_right_logical(h, jnp.int32(16))
        h = h * jnp.int32(-2048144789)                          # 0x85EBCA6B
        h = h ^ lax.shift_right_logical(h, jnp.int32(13))
        h = h * jnp.int32(-1028477387)                          # 0xC2B2AE35
        h = h ^ lax.shift_right_logical(h, jnp.int32(16))

        bits31 = lax.shift_right_logical(h, jnp.int32(1))       # uniform in [0, 2^31)
        thr = jnp.int32(min(int(round(dropout_p * (1 << 31))), (1 << 31) - 1))
        keep = bits31 >= thr                                    # P(drop) = p

        scale = jnp.asarray(1.0 / (1.0 - dropout_p), dtype=y.dtype)
        y = jnp.where(keep, y * scale, jnp.zeros_like(y))

    o_ref[...] = y.astype(o_ref.dtype)


# ----------------------------------------------------------------------------
# Tile chooser: largest (TB, TS, D) block under a per-buffer VMEM budget.
# Default 2 MiB/block keeps (in x2 double-buffer + out x2 + temps) well inside
# the default scoped VMEM on v5e (16 MiB), v6e (32 MiB) and v7x (32 MiB scoped
# / 64 MiB physical).  TS is kept a multiple of 8 (sublane) unless it equals S.
# ----------------------------------------------------------------------------
def _choose_tiles(N, S, D, itemsize, budget_bytes):
    row_bytes = S * D * itemsize
    if row_bytes <= budget_bytes:
        tb = int(max(1, min(N, budget_bytes // row_bytes)))
        ts = int(S)
    else:
        tb = 1
        ts = int(max(8, (budget_bytes // (D * itemsize)) // 8 * 8))
        ts = min(ts, int(S))
    return tb, ts


# ----------------------------------------------------------------------------
# Wrapper: slices the PE buffer like the PyTorch forward and launches the kernel.
# ----------------------------------------------------------------------------
def positional_encoding(x, pos_embedding, *, dropout_p: float = 0.0, seed: int = 0,
                        block_budget_bytes: int = 2 * 1024 * 1024):
    N, S, D = x.shape
    pe = pos_embedding[:N].astype(x.dtype)  # (N, 1, D) — same slice as the module
    seed_arr = jnp.array([seed], dtype=jnp.int32)

    tb, ts = _choose_tiles(N, S, D, x.dtype.itemsize, block_budget_bytes)

    kernel = functools.partial(
        _pos_enc_kernel,
        dropout_p=float(dropout_p), seq_len=S, emb=D, block_b=tb, block_s=ts,
    )

    grid = (pl.cdiv(N, tb), pl.cdiv(S, ts))
    return pl.pallas_call(
        kernel,
        out_shape=jax.ShapeDtypeStruct((N, S, D), x.dtype),
        grid_spec=pltpu.PrefetchScalarGridSpec(
            num_scalar_prefetch=1,                     # dropout seed (SMEM scalar)
            grid=grid,
            in_specs=[
                pl.BlockSpec((tb, ts, D), lambda bi, si, _: (bi, si, 0)),  # x
                pl.BlockSpec((tb, 1, D), lambda bi, si, _: (bi, 0, 0)),    # pe[:N]
            ],
            out_specs=pl.BlockSpec((tb, ts, D), lambda bi, si, _: (bi, si, 0)),
        ),
        compiler_params=pltpu.CompilerParams(
            # Stateless (hash-based) dropout -> no sequential dependence; lets
            # the v7x runtime shard the grid across both TensorCores.
            dimension_semantics=("parallel", "parallel"),
        ),
    )(seed_arr, x, pe)


if __name__ == "__main__":
    # Small deterministic example: batch N=2, seq S=8, emb D=32.
    N, S, D = 2, 8, 32
    MAXLEN = 64
    DROPOUT = 0.1

    key = jax.random.PRNGKey(0)
    x = jax.random.normal(key, (N, S, D), dtype=jnp.float32)

    pos_embedding = make_pos_embedding(D, maxlen=MAXLEN)

    # 1) Eval mode (dropout disabled -> pure broadcast add, exact reference).
    out_eval = positional_encoding(x, pos_embedding, dropout_p=0.0)
    out_eval = jax.block_until_ready(out_eval)
    ref = x + pos_embedding[:N]  # broadcast (N, 1, D) over S
    assert out_eval.shape == (N, S, D)
    assert jnp.allclose(out_eval, ref, atol=1e-6), "eval-mode mismatch"

    # 2) Train mode (dropout active, deterministic hash-based mask).
    out_train = positional_encoding(x, pos_embedding, dropout_p=DROPOUT, seed=1234)
    out_train = jax.block_until_ready(out_train)
    assert out_train.shape == (N, S, D)
    assert bool(jnp.all(jnp.isfinite(out_train)))
    # Surviving entries are scaled copies of the eval result; dropped are zero.
    kept = out_train != 0.0
    assert jnp.allclose(
        jnp.where(kept, out_train, 0.0),
        jnp.where(kept, ref / (1.0 - DROPOUT), 0.0),
        atol=1e-5,
    )

    print("KERNEL_OK")
</pallas_src>

<mosaic_0001>
module attributes {stable_mosaic.version = 11 : i64} {
  func.func @_pos_enc_kernel(%arg0: i32, %arg1: i32, %arg2: memref<1xi32, #tpu.memory_space<smem>>, %arg3: memref<2x8x32xf32, #tpu.memory_space<vmem>>, %arg4: memref<2x1x32xf32, #tpu.memory_space<vmem>>, %arg5: memref<2x8x32xf32, #tpu.memory_space<vmem>>) attributes {dimension_semantics = [#tpu.dimension_semantics<parallel>, #tpu.dimension_semantics<parallel>], iteration_bounds = array<i64: 1, 1>, scalar_prefetch = 1 : i64, scratch_operands = 0 : i64, tpu.core_type = #tpu.core_type<tc>, window_params = [{transform_indices = @transform_0, window_bounds = array<i64: 2, 8, 32>}, {transform_indices = @transform_1, window_bounds = array<i64: 2, 1, 32>}, {transform_indices = @transform_2, window_bounds = array<i64: 2, 8, 32>}]} {
    %c0 = arith.constant 0 : index
    %c0_0 = arith.constant 0 : index
    %c0_1 = arith.constant 0 : index
    %0 = vector.load %arg3[%c0, %c0_0, %c0_1] : memref<2x8x32xf32, #tpu.memory_space<vmem>>, vector<2x8x32xf32>
    %c0_2 = arith.constant 0 : index
    %c0_3 = arith.constant 0 : index
    %c0_4 = arith.constant 0 : index
    %1 = vector.load %arg4[%c0_2, %c0_3, %c0_4] : memref<2x1x32xf32, #tpu.memory_space<vmem>>, vector<2x1x32xf32>
    %2 = vector.broadcast %1 : vector<2x1x32xf32> to vector<2x8x32xf32>
    %3 = arith.addf %0, %2 : vector<2x8x32xf32>
    %c0_5 = arith.constant 0 : index
    %c0_6 = arith.constant 0 : index
    %c0_7 = arith.constant 0 : index
    %4 = vector.load %arg5[%c0_5, %c0_6, %c0_7] : memref<2x8x32xf32, #tpu.memory_space<vmem>>, vector<2x8x32xf32>
    tpu.vector_store %arg5[%c0_5, %c0_6, %c0_7], %3 {strides = array<i32>} : memref<2x8x32xf32, #tpu.memory_space<vmem>>, vector<2x8x32xf32>,
    return
  }
  func.func @transform_0(%arg0: i32, %arg1: i32, %arg2: memref<1xi32, #tpu.memory_space<smem>>) -> (i32, i32, i32) {
    %c0_i32 = arith.constant 0 : i32
    %c0_i32_0 = arith.constant 0 : i32
    return %arg0, %arg1, %c0_i32 : i32, i32, i32
  }
  func.func @transform_1(%arg0: i32, %arg1: i32, %arg2: memref<1xi32, #tpu.memory_space<smem>>) -> (i32, i32, i32) {
    %c0_i32 = arith.constant 0 : i32
    %c0_i32_0 = arith.constant 0 : i32
    %c0_i32_1 = arith.constant 0 : i32
    return %arg0, %c0_i32, %c0_i32_0 : i32, i32, i32
  }
  func.func @transform_2(%arg0: i32, %arg1: i32, %arg2: memref<1xi32, #tpu.memory_space<smem>>) -> (i32, i32, i32) {
    %c0_i32 = arith.constant 0 : i32
    %c0_i32_0 = arith.constant 0 : i32
    return %arg0, %arg1, %c0_i32 : i32, i32, i32
  }
}

</mosaic_0001>

<llo_original>
// kernel: tpu_custom_call.1
$region0: #{tpu_custom_call.1}
  #allocation0 [shape = 'u32[]', space=smem, size = 0x4, offset = 0x4, fixed_abs, tag = 'smem constant byte address 0x4 - core index']
  #allocation1 [shape = 'u32[144,128]{1,0:T(1,128)}', space=vmem, size = 0x12000, scoped, tag = 'internal scratch']
  #allocation2 [shape = 's32[1]{0}', space=sflag, size = 0x4, scoped, tag = 'scoped memory for tpu_custom_call.1']
  #allocation3 [shape = 's32[1]{0:T(128)S(6)}', space=smem, size = 0x200, scoped, tag = 'prefetched SMEM operand 0']
  %s0 = inlined_call_operand.<no memory space> [shape: s32[1], index: 0, kind: input, shape index: {}]
  %s1 = inlined_call_operand.hbm [shape: f32[2,8,32], index: 1, kind: input, shape index: {}]
  %s2 = inlined_call_operand.vmem [shape: f32[2,1,32], index: 2, kind: input, shape index: {}]
  %s3 = inlined_call_operand.hbm [shape: f32[2,8,32], index: 3, kind: output, shape index: {}]
  %s4 = sld [smem:[#allocation0]]
  $region22: #{tpu_custom_call.1} parent=0
    _
  %s6 = ssub.s32 1, %s4
  %s7 = scalar_select 0, %s6, %s4
  %8 = sst [smem:[#allocation3]] %s0
  $region1: #{tpu_custom_call.1} parent=0
    #allocation4 [shape = 'u8[8192]{0}', space=vmem, size = 0x2000, scoped, tag = 'input window, operand 1, single buffered']
    #allocation5 [shape = 's32[1]{0}', space=sflag, size = 0x4, scoped, tag = 'scoped memory for tpu_custom_call.1']
    #allocation6 [shape = 's32[1]{0}', space=sflag, size = 0x4, scoped, tag = 'scoped memory for tpu_custom_call.1']
    #allocation7 [shape = 'u8[8192]{0}', space=vmem, size = 0x2000, scoped, tag = 'output window, operand 0, single buffered']
    %9 = vsyncpa [#allocation5], 0
    %10 = vsyncpa [#allocation6], 0
    // Predicated region
    $region2: #{tpu_custom_call.1} parent=1 // pred_check
      _
    $region3: #{tpu_custom_call.1} parent=1 // pred_check_branch
      %12 = sbr.rel (0) target = $region5
    $region4: #{tpu_custom_call.1} parent=1 // pred_region
      %s14 = ssub.s32 256, 256
      %15 = vsyncadd [#allocation5], %s14
      %s16 = sshll.u32 [#allocation4], 4
      %s17 = int_to_ptr.vmem [resolvable:$true] %s16
      %22 = dma.hbm_to_vmem [thread:$0]  %s1, 256, %s17, [#allocation5], 128, 128, 8
    $region5: #{tpu_custom_call.1} parent=1 // pred_fallthru
      _
    // Predicated region
    $region6: #{tpu_custom_call.1} parent=1 // pred_check
      _
    $region7: #{tpu_custom_call.1} parent=1 // pred_check_branch
      %24 = sbr.rel (0) target = $region9
    $region8: #{tpu_custom_call.1} parent=1 // pred_region
      _
    $region9: #{tpu_custom_call.1} parent=1 // pred_fallthru
      _
    // Predicated region
    $region10: #{tpu_custom_call.1} parent=1 // pred_check
      _
    $region11: #{tpu_custom_call.1} parent=1 // pred_check_branch
      %26 = sbr.rel (0) target = $region13
    $region12: #{tpu_custom_call.1} parent=1 // pred_region
      %27 = dma.done [#allocation5], 256
    $region13: #{tpu_custom_call.1} parent=1 // pred_fallthru
      _
    %v28 = vld [vmem:[#allocation4] sm:$0xff]
    %v29 = vld [vmem:[#allocation4 + $0x8] sm:$0xff]
    %v30 = vld [vmem:[%s2] sm:$0x1]
    %v31 = vld [vmem:[%s2 + $0x1] sm:$0x1]
    %v34 = vlaneseq
    %v35 = vshrl.u32 %v34, 7
    %v36 = vsub.s32 0, %v35
    %v37 = vrot.slane %v30, %v36
    %v38 = vlaneseq
    %v39 = vshrl.u32 %v38, 7
    %v40 = vsub.s32 0, %v39
    %v41 = vrot.slane %v31, %v40
    %v44 = vadd.f32 %v28, %v37
    %v45 = vadd.f32 %v29, %v41
    %vm46 = vcmask 261120
    %47 = vst.msk [vmem:[#allocation7] sm:$0xff] %vm46, %v44
    %48 = vst.msk [vmem:[#allocation7 + $0x8] sm:$0xff] %vm46, %v45
    // Predicated region
    $region14: #{tpu_custom_call.1} parent=1 // pred_check
      _
    $region15: #{tpu_custom_call.1} parent=1 // pred_check_branch
      %50 = sbr.rel (0) target = $region17
    $region16: #{tpu_custom_call.1} parent=1 // pred_region
      %s52 = ssub.s32 256, 256
      %53 = vsyncadd [#allocation6], %s52
      %s54 = sshll.u32 [#allocation7], 4
      %s55 = int_to_ptr.vmem [resolvable:$true] %s54
      %60 = dma.vmem_to_hbm [thread:$0]  %s55, 256, %s3, [#allocation6], 128, 128, 8
    $region17: #{tpu_custom_call.1} parent=1 // pred_fallthru
      _
    // Predicated region
    $region18: #{tpu_custom_call.1} parent=1 // pred_check
      _
    $region19: #{tpu_custom_call.1} parent=1 // pred_check_branch
      %62 = sbr.rel (0) target = $region21
    $region20: #{tpu_custom_call.1} parent=1 // pred_region
      %63 = dma.done [#allocation6], 256
    $region21: #{tpu_custom_call.1} parent=1 // pred_fallthru
      _
    %64 = vsyncpa [#allocation5], 1
    %65 = vsyncpa [#allocation6], 1

</llo_original>
